<compile_context>
chip_gen: v7x
topology: tpu7x:2x2x1
jax: 0.10.0
libtpu: 0.0.40
codegen_flags: <defaults>
</compile_context>

<pallas_src>
import functools
import math

import jax
import jax.numpy as jnp
from jax.experimental import pallas as pl
from jax.experimental.pallas import tpu as pltpu


def _nbytes(shape, dtype):
    return math.prod(shape) * jnp.dtype(dtype).itemsize


def _vmem_limit(estimate_bytes):
    # Leave headroom below the smallest physical VMEM (64 MiB/core on v7x): never
    # request more than 56 MiB; never less than a 32 MiB floor.
    return int(min(56 * 2**20, max(32 * 2**20, 2 * estimate_bytes)))


def _const_spec(shape, *, single_buffer=False):
    """Full-array block with a constant index_map: fetched once, never re-DMA'd."""
    index_map = lambda *idx: (0,) * len(shape)
    if single_buffer:
        # Constant blocks still get the default double buffer; Buffered(1) halves the
        # VMEM footprint of the large weight operands (mandatory headroom on v7x for
        # GPT-2 large/XL).  Off by default: not every jax release honors
        # BlockSpec.pipeline_mode in the TPU lowering.
        return pl.BlockSpec(shape, index_map, pipeline_mode=pl.Buffered(1))
    return pl.BlockSpec(shape, index_map)


# ----------------------------- kernel 1: LN1 + QKV -----------------------------
def _ln_qkv_kernel(x_ref, g_ref, b_ref, w_ref, wb_ref, qkv_ref, *, eps):
    x = x_ref[0].astype(jnp.float32)                          # (tq, H)
    mu = jnp.mean(x, axis=-1, keepdims=True)
    var = jnp.mean(jnp.square(x - mu), axis=-1, keepdims=True)
    h = (x - mu) * jax.lax.rsqrt(var + eps) * g_ref[0] + b_ref[0]
    # bf16 x bf16 -> f32 acc (MXU); 1/sqrt(hd) is already folded into the Q columns.
    qkv = jnp.dot(h.astype(jnp.bfloat16), w_ref[...],
                  preferred_element_type=jnp.float32) + wb_ref[0]
    qkv_ref[0] = qkv.astype(qkv_ref.dtype)


# -------------------- kernel 2: flash attention (heads batched) ----------------
def _flash_attn_kernel(q_ref, k_ref, v_ref, o_ref, m_sc, l_sc, acc_sc, *, tq, tkv):
    qi = pl.program_id(1)
    ki = pl.program_id(2)

    @pl.when(ki == 0)
    def _init():
        m_sc[...] = jnp.full_like(m_sc, -jnp.inf)
        l_sc[...] = jnp.zeros_like(l_sc)
        acc_sc[...] = jnp.zeros_like(acc_sc)

    def online_update(s):
        m_prev = m_sc[...]
        m_new = jnp.maximum(m_prev, jnp.max(s, axis=-1, keepdims=True))
        alpha = jnp.exp(m_prev - m_new)
        p = jnp.exp(s - m_new)
        l_sc[...] = alpha * l_sc[...] + jnp.sum(p, axis=-1, keepdims=True)
        acc_sc[...] = alpha * acc_sc[...] + jnp.einsum(
            "hqk,hkd->hqd", p.astype(v_ref.dtype), v_ref[0],
            preferred_element_type=jnp.float32)
        m_sc[...] = m_new

    # Causal tiling (tq == tkv): tiles strictly above the diagonal (ki > qi) are fully
    # masked -> skip the QK matmul, exp, mask and rescale entirely.  Their K/V DMAs are
    # also elided by the clamped index_map in the wrapper.
    @pl.when(ki <= qi)
    def _compute():
        # scores for all heads in one batched matmul (f32 accumulation); no per-tile
        # scale (folded into the Q projection weights in K1).
        s = jnp.einsum("hqd,hkd->hqk", q_ref[0], k_ref[0],
                       preferred_element_type=jnp.float32)

        @pl.when(ki == qi)
        def _diag():
            # Only the tile straddling the diagonal needs a mask; build it in 2-D and
            # let the select broadcast over heads (no (nh,tq,tkv) int32 iotas).
            row = jax.lax.broadcasted_iota(jnp.int32, (tq, tkv), 0)
            col = jax.lax.broadcasted_iota(jnp.int32, (tq, tkv), 1)
            online_update(jnp.where((col <= row)[None], s, jnp.float32(-1e30)))

        @pl.when(ki < qi)
        def _below_diag():
            online_update(s)                                   # fully visible: no mask

    @pl.when(ki == pl.num_programs(2) - 1)
    def _finalize():
        o_ref[0] = (acc_sc[...] *
                    pl.reciprocal(l_sc[...], approx=True)).astype(o_ref.dtype)


# -------------- kernel 3: out-proj + residual + LN2 + MLP + residual -----------
def _proj_mlp_kernel(x_ref, a_ref, pw_ref, pb_ref, g2_ref, b2_ref,
                     fcw_ref, fcb_ref, pjw_ref, pjb_ref, o_ref, *, eps, num_heads):
    x = x_ref[0].astype(jnp.float32)                          # (tq, H) residual stream

    # Attention out-projection with the head merge folded into the matmul:
    #   attn_flat @ W_proj == sum_h attn_h @ W_proj[h]   (W_proj pre-reshaped (nh,hd,H))
    # K2's (nh, tq, hd) output is consumed directly -> no XLA transpose/merge pass.
    y = jnp.zeros(x.shape, jnp.float32)
    for hh in range(num_heads):                               # static, unrolled
        y = y + jnp.dot(a_ref[0, hh], pw_ref[hh],
                        preferred_element_type=jnp.float32)
    x = x + y + pb_ref[0]                                     # residual 1

    mu = jnp.mean(x, axis=-1, keepdims=True)
    var = jnp.mean(jnp.square(x - mu), axis=-1, keepdims=True)
    h2 = (x - mu) * jax.lax.rsqrt(var + eps) * g2_ref[0] + b2_ref[0]

    ff = jnp.dot(h2.astype(jnp.bfloat16), fcw_ref[...],
                 preferred_element_type=jnp.float32) + fcb_ref[0]
    c = jnp.float32(0.7978845608028654)                       # sqrt(2/pi), gelu_new
    ff = 0.5 * ff * (1.0 + jnp.tanh(c * (ff + 0.044715 * ff * ff * ff)))
    ff = jnp.dot(ff.astype(jnp.bfloat16), pjw_ref[...],
                 preferred_element_type=jnp.float32) + pjb_ref[0]
    o_ref[0] = (x + ff).astype(o_ref.dtype)                   # residual 2


# ------------------------------ one-time weight prep ----------------------------
def prepare_params(params, *, num_heads):
    """One-time (model-init) weight prep: bf16 cast, 1/sqrt(hd) folded into the Q
    projection, proj_w reshaped per-head.  Do NOT call per forward step — a per-call
    cast adds a full f32 read + bf16 write HBM pass over every weight."""
    H = params["attn_w"].shape[0]
    hd = H // num_heads
    scale = 1.0 / math.sqrt(hd)
    bf16 = jnp.bfloat16
    qkv_scale = jnp.concatenate([jnp.full((H,), scale, jnp.float32),
                                 jnp.ones((2 * H,), jnp.float32)])
    return {
        "ln1_g": params["ln1_g"].astype(jnp.float32),
        "ln1_b": params["ln1_b"].astype(jnp.float32),
        "attn_w": (params["attn_w"] * qkv_scale[None, :]).astype(bf16),
        "attn_b": (params["attn_b"] * qkv_scale[None, :]).astype(jnp.float32),
        "proj_w": params["proj_w"].reshape(num_heads, hd, H).astype(bf16),
        "proj_b": params["proj_b"].astype(jnp.float32),
        "ln2_g": params["ln2_g"].astype(jnp.float32),
        "ln2_b": params["ln2_b"].astype(jnp.float32),
        "fc_w": params["fc_w"].astype(bf16),
        "fc_b": params["fc_b"].astype(jnp.float32),
        "fcproj_w": params["fcproj_w"].astype(bf16),
        "fcproj_b": params["fcproj_b"].astype(jnp.float32),
    }


# ------------------------------------ wrapper -----------------------------------
def gpt2_block(x, prepared, *, num_heads, eps=1e-5, seq_tile=256,
               single_buffer_weights=False):
    """x: (B, T, H) f32; `prepared` comes from prepare_params().
    seq_tile: 256 for v6e/v7x (256-wide MXU); 128 is fine for K2 on v5e.
    single_buffer_weights: set True on v7x / GPT-2 large+ (needs BlockSpec.pipeline_mode
    support in the installed jax)."""
    B, T, H = x.shape
    hd = H // num_heads
    inner = prepared["fc_w"].shape[1]
    bf16 = jnp.bfloat16

    tq = min(T, seq_tile)
    assert T % tq == 0, "sequence length must be divisible by the sequence tile"
    tkv = tq                                                   # skip/mask logic assumes tq == tkv
    nq, nkv = T // tq, T // tkv

    cs = functools.partial(_const_spec, single_buffer=single_buffer_weights)

    # ---- K1: LN1 + QKV projection -> (B, T, 3H) bf16 ----
    k1_est = (2 * (_nbytes((1, tq, H), x.dtype) + _nbytes((1, tq, 3 * H), bf16))
              + 2 * (_nbytes(prepared["attn_w"].shape, bf16)
                     + _nbytes(prepared["attn_b"].shape, jnp.float32)
                     + 2 * _nbytes((1, H), jnp.float32)))
    qkv = pl.pallas_call(
        functools.partial(_ln_qkv_kernel, eps=eps),
        out_shape=jax.ShapeDtypeStruct((B, T, 3 * H), bf16),
        grid=(B, nq),
        in_specs=[
            pl.BlockSpec((1, tq, H), lambda b, t: (b, t, 0)),
            cs(prepared["ln1_g"].shape), cs(prepared["ln1_b"].shape),
            cs(prepared["attn_w"].shape), cs(prepared["attn_b"].shape),
        ],
        out_specs=pl.BlockSpec((1, tq, 3 * H), lambda b, t: (b, t, 0)),
        compiler_params=pltpu.CompilerParams(
            dimension_semantics=("parallel", "parallel"),
            vmem_limit_bytes=_vmem_limit(k1_est)),
    )(x, prepared["ln1_g"], prepared["ln1_b"], prepared["attn_w"], prepared["attn_b"])

    # ---- head split (the merge on the output side is folded into K3) ----
    # TODO(synk): reading Q/K/V straight out of the (B,T,3H) buffer would remove these
    # XLA relayouts too, but needs an in-kernel (tq,H)->(nh,tq,hd) major-dim transpose
    # that Mosaic does not lower reliably; kept outside for robustness.
    q, k, v = jnp.split(qkv, 3, axis=-1)

    def to_heads(t):                                           # (B,T,H) -> (B,nh,T,hd)
        return t.reshape(B, T, num_heads, hd).transpose(0, 2, 1, 3)

    q, k, v = to_heads(q), to_heads(k), to_heads(v)

    # ---- K2: flash-style causal attention, heads batched, masked tiles skipped ----
    qblk = (1, num_heads, tq, hd)
    kblk = (1, num_heads, tkv, hd)

    def kv_index(b, qi, ki):
        # Clamp fully-masked tiles (ki > qi) to the last useful tile: the block index
        # is then unchanged step-to-step and the pipeline elides their K/V DMA.
        return (b, 0, jnp.minimum(ki, qi), 0)

    k2_est = (2 * (2 * _nbytes(qblk, bf16) + 2 * _nbytes(kblk, bf16))
              + _nbytes((num_heads, tq, tkv), jnp.float32)
              + 2 * _nbytes((num_heads, tq, 1), jnp.float32)
              + _nbytes((num_heads, tq, hd), jnp.float32))
    attn = pl.pallas_call(
        functools.partial(_flash_attn_kernel, tq=tq, tkv=tkv),
        out_shape=jax.ShapeDtypeStruct((B, num_heads, T, hd), bf16),
        grid=(B, nq, nkv),
        in_specs=[
            pl.BlockSpec(qblk, lambda b, qi, ki: (b, 0, qi, 0)),
            pl.BlockSpec(kblk, kv_index),
            pl.BlockSpec(kblk, kv_index),
        ],
        out_specs=pl.BlockSpec(qblk, lambda b, qi, ki: (b, 0, qi, 0)),
        scratch_shapes=[
            pltpu.VMEM((num_heads, tq, 1), jnp.float32),   # running max
            pltpu.VMEM((num_heads, tq, 1), jnp.float32),   # running denom
            pltpu.VMEM((num_heads, tq, hd), jnp.float32),  # output accumulator
        ],
        compiler_params=pltpu.CompilerParams(
            dimension_semantics=("parallel", "parallel", "arbitrary"),
            vmem_limit_bytes=_vmem_limit(k2_est)),
    )(q, k, v)

    # ---- K3: out-proj (+ implicit head merge) + residual + LN2 + MLP + residual ----
    # TODO(synk): for GPT-2 large/XL on v7x (64 MiB VMEM), tile fc_w / fcproj_w over
    #             the inner dim with an f32 accumulator instead of keeping both MLP
    #             weights fully resident.
    k3_est = (2 * (2 * _nbytes((1, tq, H), x.dtype)
                   + _nbytes((1, num_heads, tq, hd), bf16))
              + 2 * (_nbytes(prepared["proj_w"].shape, bf16)
                     + _nbytes(prepared["fc_w"].shape, bf16)
                     + _nbytes(prepared["fcproj_w"].shape, bf16))
              + 2 * _nbytes((tq, inner), jnp.float32))
    out = pl.pallas_call(
        functools.partial(_proj_mlp_kernel, eps=eps, num_heads=num_heads),
        out_shape=jax.ShapeDtypeStruct((B, T, H), x.dtype),
        grid=(B, nq),
        in_specs=[
            pl.BlockSpec((1, tq, H), lambda b, t: (b, t, 0)),                # residual
            pl.BlockSpec((1, num_heads, tq, hd), lambda b, t: (b, 0, t, 0)),  # attn heads
            cs(prepared["proj_w"].shape), cs(prepared["proj_b"].shape),
            cs(prepared["ln2_g"].shape), cs(prepared["ln2_b"].shape),
            cs(prepared["fc_w"].shape), cs(prepared["fc_b"].shape),
            cs(prepared["fcproj_w"].shape), cs(prepared["fcproj_b"].shape),
        ],
        out_specs=pl.BlockSpec((1, tq, H), lambda b, t: (b, t, 0)),
        compiler_params=pltpu.CompilerParams(
            dimension_semantics=("parallel", "parallel"),
            vmem_limit_bytes=_vmem_limit(k3_est)),
    )(x, attn, prepared["proj_w"], prepared["proj_b"], prepared["ln2_g"],
      prepared["ln2_b"], prepared["fc_w"], prepared["fc_b"],
      prepared["fcproj_w"], prepared["fcproj_b"])

    return out


# ------------------------------- pure-JAX reference -----------------------------
def gpt2_block_reference(x, params, *, num_heads, eps=1e-5):
    """Pure-JAX f32 reference matching the PyTorch MyGPT2Block forward."""
    B, T, H = x.shape
    hd = H // num_heads

    def ln(v, g, b):
        mu = jnp.mean(v, axis=-1, keepdims=True)
        var = jnp.mean((v - mu) ** 2, axis=-1, keepdims=True)
        return (v - mu) / jnp.sqrt(var + eps) * g[0] + b[0]

    h = ln(x, params["ln1_g"], params["ln1_b"])
    qkv = h @ params["attn_w"] + params["attn_b"][0]
    q, k, v = jnp.split(qkv, 3, axis=-1)

    def heads(t):
        return t.reshape(B, T, num_heads, hd).transpose(0, 2, 1, 3)

    q, k, v = heads(q), heads(k), heads(v)
    s = jnp.einsum("bhtd,bhsd->bhts", q, k) / jnp.sqrt(jnp.float32(hd))
    mask = jnp.tril(jnp.ones((T, T), dtype=bool))
    s = jnp.where(mask[None, None], s, -1e30)
    p = jax.nn.softmax(s, axis=-1)
    a = jnp.einsum("bhts,bhsd->bhtd", p, v)
    a = a.transpose(0, 2, 1, 3).reshape(B, T, H)
    a = a @ params["proj_w"] + params["proj_b"][0]
    x = x + a

    h = ln(x, params["ln2_g"], params["ln2_b"])
    ff = h @ params["fc_w"] + params["fc_b"][0]
    c = 0.7978845608028654
    ff = 0.5 * ff * (1.0 + jnp.tanh(c * (ff + 0.044715 * ff ** 3)))
    ff = ff @ params["fcproj_w"] + params["fcproj_b"][0]
    return x + ff


def init_params(key, hidden, inner):
    ks = jax.random.split(key, 4)
    std = 0.02
    return {
        "ln1_g": jnp.ones((1, hidden), jnp.float32),
        "ln1_b": jnp.zeros((1, hidden), jnp.float32),
        "attn_w": std * jax.random.normal(ks[0], (hidden, 3 * hidden), jnp.float32),
        "attn_b": jnp.zeros((1, 3 * hidden), jnp.float32),
        "proj_w": std * jax.random.normal(ks[1], (hidden, hidden), jnp.float32),
        "proj_b": jnp.zeros((1, hidden), jnp.float32),
        "ln2_g": jnp.ones((1, hidden), jnp.float32),
        "ln2_b": jnp.zeros((1, hidden), jnp.float32),
        "fc_w": std * jax.random.normal(ks[2], (hidden, inner), jnp.float32),
        "fc_b": jnp.zeros((1, inner), jnp.float32),
        "fcproj_w": std * jax.random.normal(ks[3], (inner, hidden), jnp.float32),
        "fcproj_b": jnp.zeros((1, hidden), jnp.float32),
    }


def _check(B, T, H, num_heads, inner, seq_tile, seed):
    key = jax.random.PRNGKey(seed)
    kx, kp = jax.random.split(key)
    x = jax.random.normal(kx, (B, T, H), jnp.float32)
    params = init_params(kp, H, inner)
    prepared = prepare_params(params, num_heads=num_heads)     # one-time weight prep

    out = jax.block_until_ready(
        gpt2_block(x, prepared, num_heads=num_heads, seq_tile=seq_tile))
    ref = gpt2_block_reference(x, params, num_heads=num_heads)

    assert out.shape == (B, T, H)
    assert bool(jnp.all(jnp.isfinite(out)))
    max_err = float(jnp.max(jnp.abs(out - ref)))
    # bf16 matmul inputs (f32 accumulation) -> loosened tolerance vs f32 reference
    assert jnp.allclose(out, ref, atol=3e-2, rtol=3e-2), max_err
    return out


if __name__ == "__main__":
    # Small-shape check (single tile, matches the module's tiny-config semantics).
    _check(B=2, T=8, H=32, num_heads=4, inner=4 * 32, seq_tile=128, seed=0)
    # Tiled check: exercises multi-tile causal skipping/masking and head_dim=64.
    _check(B=2, T=512, H=128, num_heads=2, inner=4 * 128, seq_tile=128, seed=0)
    print("KERNEL_OK")
</pallas_src>

<mosaic_0001>
module attributes {stable_mosaic.version = 11 : i64} {
  func.func @_ln_qkv_kernel(%arg0: i32, %arg1: i32, %arg2: memref<1x8x32xf32, #tpu.memory_space<vmem>>, %arg3: memref<1x32xf32, #tpu.memory_space<vmem>>, %arg4: memref<1x32xf32, #tpu.memory_space<vmem>>, %arg5: memref<32x96xbf16, #tpu.memory_space<vmem>>, %arg6: memref<1x96xf32, #tpu.memory_space<vmem>>, %arg7: memref<1x8x96xbf16, #tpu.memory_space<vmem>>) attributes {dimension_semantics = [#tpu.dimension_semantics<parallel>, #tpu.dimension_semantics<parallel>], iteration_bounds = array<i64: 2, 1>, scalar_prefetch = 0 : i64, scratch_operands = 0 : i64, tpu.core_type = #tpu.core_type<tc>, window_params = [{transform_indices = @transform_0, window_bounds = array<i64: 1, 8, 32>}, {pipeline_mode = #tpu.pipeline_mode<synchronous>, transform_indices = @transform_1, window_bounds = array<i64: 1, 32>}, {pipeline_mode = #tpu.pipeline_mode<synchronous>, transform_indices = @transform_2, window_bounds = array<i64: 1, 32>}, {pipeline_mode = #tpu.pipeline_mode<synchronous>, transform_indices = @transform_3, window_bounds = array<i64: 32, 96>}, {pipeline_mode = #tpu.pipeline_mode<synchronous>, transform_indices = @transform_4, window_bounds = array<i64: 1, 96>}, {transform_indices = @transform_5, window_bounds = array<i64: 1, 8, 96>}]} {
    %c0 = arith.constant 0 : index
    %c0_0 = arith.constant 0 : index
    %c0_1 = arith.constant 0 : index
    %0 = vector.load %arg2[%c0, %c0_0, %c0_1] : memref<1x8x32xf32, #tpu.memory_space<vmem>>, vector<1x8x32xf32>
    %1 = vector.shape_cast %0 : vector<1x8x32xf32> to vector<8x32xf32>
    %cst = arith.constant dense<0.000000e+00> : vector<8xf32>
    %2 = vector.multi_reduction <add>, %1, %cst [1] : vector<8x32xf32> to vector<8xf32>
    %3 = vector.shape_cast %2 : vector<8xf32> to vector<8x1xf32>
    %cst_2 = arith.constant 3.200000e+01 : f32
    %4 = vector.broadcast %cst_2 : f32 to vector<8x1xf32>
    %5 = arith.divf %3, %4 : vector<8x1xf32>
    %6 = vector.broadcast %5 : vector<8x1xf32> to vector<8x32xf32>
    %7 = arith.subf %1, %6 : vector<8x32xf32>
    %8 = arith.mulf %7, %7 : vector<8x32xf32>
    %cst_3 = arith.constant dense<0.000000e+00> : vector<8xf32>
    %9 = vector.multi_reduction <add>, %8, %cst_3 [1] : vector<8x32xf32> to vector<8xf32>
    %10 = vector.shape_cast %9 : vector<8xf32> to vector<8x1xf32>
    %cst_4 = arith.constant 3.200000e+01 : f32
    %11 = vector.broadcast %cst_4 : f32 to vector<8x1xf32>
    %12 = arith.divf %10, %11 : vector<8x1xf32>
    %13 = vector.broadcast %5 : vector<8x1xf32> to vector<8x32xf32>
    %14 = arith.subf %1, %13 : vector<8x32xf32>
    %cst_5 = arith.constant 9.99999974E-6 : f32
    %15 = vector.broadcast %cst_5 : f32 to vector<8x1xf32>
    %16 = arith.addf %12, %15 : vector<8x1xf32>
    %17 = math.rsqrt %16 : vector<8x1xf32>
    %18 = vector.broadcast %17 : vector<8x1xf32> to vector<8x32xf32>
    %19 = arith.mulf %14, %18 : vector<8x32xf32>
    %c0_6 = arith.constant 0 : index
    %c0_7 = arith.constant 0 : index
    %20 = vector.load %arg3[%c0_6, %c0_7] : memref<1x32xf32, #tpu.memory_space<vmem>>, vector<1x32xf32>
    %21 = vector.shape_cast %20 : vector<1x32xf32> to vector<32xf32>
    %22 = vector.shape_cast %21 : vector<32xf32> to vector<1x32xf32>
    %23 = vector.broadcast %22 : vector<1x32xf32> to vector<8x32xf32>
    %24 = arith.mulf %19, %23 : vector<8x32xf32>
    %c0_8 = arith.constant 0 : index
    %c0_9 = arith.constant 0 : index
    %25 = vector.load %arg4[%c0_8, %c0_9] : memref<1x32xf32, #tpu.memory_space<vmem>>, vector<1x32xf32>
    %26 = vector.shape_cast %25 : vector<1x32xf32> to vector<32xf32>
    %27 = vector.shape_cast %26 : vector<32xf32> to vector<1x32xf32>
    %28 = vector.broadcast %27 : vector<1x32xf32> to vector<8x32xf32>
    %29 = arith.addf %24, %28 : vector<8x32xf32>
    %30 = arith.truncf %29 : vector<8x32xf32> to vector<8x32xbf16>
    %c0_10 = arith.constant 0 : index
    %c0_11 = arith.constant 0 : index
    %31 = vector.load %arg5[%c0_10, %c0_11] : memref<32x96xbf16, #tpu.memory_space<vmem>>, vector<32x96xbf16>
    %cst_12 = arith.constant dense<0.000000e+00> : vector<8x96xf32>
    %32 = tpu.matmul %30, %31, %cst_12 {dimension_numbers = #tpu.dot_dimension_numbers<[1], [0], [0], [1], [0, 0, 1, 1], [], []>} : vector<8x32xbf16>, vector<32x96xbf16>, vector<8x96xf32> -> vector<8x96xf32>
    %c0_13 = arith.constant 0 : index
    %c0_14 = arith.constant 0 : index
    %33 = vector.load %arg6[%c0_13, %c0_14] : memref<1x96xf32, #tpu.memory_space<vmem>>, vector<1x96xf32>
    %34 = vector.shape_cast %33 : vector<1x96xf32> to vector<96xf32>
    %35 = vector.shape_cast %34 : vector<96xf32> to vector<1x96xf32>
    %36 = vector.broadcast %35 : vector<1x96xf32> to vector<8x96xf32>
    %37 = arith.addf %32, %36 : vector<8x96xf32>
    %38 = arith.truncf %37 : vector<8x96xf32> to vector<8x96xbf16>
    %c0_15 = arith.constant 0 : index
    %c0_16 = arith.constant 0 : index
    %c0_17 = arith.constant 0 : index
    %39 = vector.load %arg7[%c0_15, %c0_16, %c0_17] : memref<1x8x96xbf16, #tpu.memory_space<vmem>>, vector<1x8x96xbf16>
    %40 = vector.shape_cast %39 : vector<1x8x96xbf16> to vector<8x96xbf16>
    %41 = vector.shape_cast %38 : vector<8x96xbf16> to vector<1x8x96xbf16>
    tpu.vector_store %arg7[%c0_15, %c0_16, %c0_17], %41 {strides = array<i32>} : memref<1x8x96xbf16, #tpu.memory_space<vmem>>, vector<1x8x96xbf16>,
    return
  }
  func.func @transform_0(%arg0: i32, %arg1: i32) -> (i32, i32, i32) {
    %c0_i32 = arith.constant 0 : i32
    %c0_i32_0 = arith.constant 0 : i32
    return %arg0, %arg1, %c0_i32 : i32, i32, i32
  }
  func.func @transform_1(%arg0: i32, %arg1: i32) -> (i32, i32) {
    %c0_i32 = arith.constant 0 : i32
    %c0_i32_0 = arith.constant 0 : i32
    %c0_i32_1 = arith.constant 0 : i32
    return %c0_i32, %c0_i32_0 : i32, i32
  }
  func.func @transform_2(%arg0: i32, %arg1: i32) -> (i32, i32) {
    %c0_i32 = arith.constant 0 : i32
    %c0_i32_0 = arith.constant 0 : i32
    %c0_i32_1 = arith.constant 0 : i32
    return %c0_i32, %c0_i32_0 : i32, i32
  }
  func.func @transform_3(%arg0: i32, %arg1: i32) -> (i32, i32) {
    %c0_i32 = arith.constant 0 : i32
    %c0_i32_0 = arith.constant 0 : i32
    %c0_i32_1 = arith.constant 0 : i32
    return %c0_i32, %c0_i32_0 : i32, i32
  }
  func.func @transform_4(%arg0: i32, %arg1: i32) -> (i32, i32) {
    %c0_i32 = arith.constant 0 : i32
    %c0_i32_0 = arith.constant 0 : i32
    %c0_i32_1 = arith.constant 0 : i32
    return %c0_i32, %c0_i32_0 : i32, i32
  }
  func.func @transform_5(%arg0: i32, %arg1: i32) -> (i32, i32, i32) {
    %c0_i32 = arith.constant 0 : i32
    %c0_i32_0 = arith.constant 0 : i32
    return %arg0, %arg1, %c0_i32 : i32, i32, i32
  }
}

</mosaic_0001>

<llo_original>
// kernel: tpu_custom_call.1
$region0: #{tpu_custom_call.1}
  #allocation0 [shape = 'u32[]', space=smem, size = 0x4, offset = 0x4, fixed_abs, tag = 'smem constant byte address 0x4 - core index']
  #allocation1 [shape = 'u32[144,128]{1,0:T(1,128)}', space=vmem, size = 0x12000, scoped, tag = 'internal scratch']
  %s0 = inlined_call_operand.hbm [shape: f32[2,8,32], index: 0, kind: input, shape index: {}]
  %s1 = inlined_call_operand.vmem [shape: f32[1,32], index: 1, kind: input, shape index: {}]
  %s2 = inlined_call_operand.vmem [shape: f32[1,32], index: 2, kind: input, shape index: {}]
  %s3 = inlined_call_operand.hbm [shape: bf16[32,96], index: 3, kind: input, shape index: {}]
  %s4 = inlined_call_operand.vmem [shape: f32[1,96], index: 4, kind: input, shape index: {}]
  %s5 = inlined_call_operand.hbm [shape: bf16[2,8,96], index: 5, kind: output, shape index: {}]
  %s6 = sld [smem:[#allocation0]]
  $region61: #{tpu_custom_call.1} parent=0
    _
  %s8 = ssub.s32 1, %s6
  %s9 = scalar_select 0, %s8, %s6
  $region1: #{tpu_custom_call.1} parent=0
    #allocation2 [shape = 'u8[8192]{0}', space=vmem, size = 0x2000, scoped, tag = 'input window, operand 0']
    #allocation3 [shape = 's32[2]{0}', space=sflag, size = 0x8, scoped, tag = 'scoped memory for tpu_custom_call.1']
    #allocation4 [shape = 's32[2]{0}', space=sflag, size = 0x8, scoped, tag = 'scoped memory for tpu_custom_call.1']
    #allocation5 [shape = 'u8[8192]{0}', space=vmem, size = 0x2000, scoped, tag = 'input window, operand 3, single buffered']
    #allocation6 [shape = 's32[1]{0}', space=sflag, size = 0x4, scoped, tag = 'scoped memory for tpu_custom_call.1']
    #allocation7 [shape = 'u8[4096]{0}', space=vmem, size = 0x1000, scoped, tag = 'output window, operand 0']
    %10 = vsyncpa [#allocation3], 0
    %s11 = scalar_lea.sflag [#allocation3], 1
    %12 = vsyncpa %s11, 0
    %13 = vsyncpa [#allocation6], 0
    %14 = vsyncpa [#allocation4], 0
    %s15 = scalar_lea.sflag [#allocation4], 1
    %16 = vsyncpa %s15, 0
    loop: start=0, step=1, limit=4
    $region2: #{tpu_custom_call.1} parent=1 // loop_pre_header
      _
    $region3: #{tpu_custom_call.1} parent=1 // loop_header
      %s18 = sphi 0, %s22
      %p19 = scmp.ge.s32.totalorder %s18, 4
      %s25 = sphi 0, %s37
      %s26 = sphi 0, %s33
      %s27 = sphi 0, %s25
      %s28 = sphi 0, %s26
      %s29 = sphi 0, %s27
      %s30 = sphi 0, %s28
      %s42 = sphi 0, %s44
      %s45 = sphi 0, %s42
      %s46 = sphi 0, %s45
      %s62 = sphi 0, %s46
      %s66 = sphi 0, %s66
      %s68 = sphi 0, %s66
      %s69 = sphi 0, %s68
      %s83 = sphi 0, %s69
      %s87 = sphi 0, %s87
      %s89 = sphi 0, %s87
      %s90 = sphi 0, %s89
      %s104 = sphi 0, %s90
      %s108 = sphi 0, %s108
      %s110 = sphi 0, %s108
      %s111 = sphi 0, %s110
      %s125 = sphi 0, %s111
      %s129 = sphi 0, %s129
      %s131 = sphi 0, %s129
      %s132 = sphi 0, %s131
      %s146 = sphi 0, %s132
      %s154 = sphi 0, %s156
      %s157 = sphi 0, %s154
      %s158 = sphi 0, %s157
      %s174 = sphi 0, %s158
    $region4: #{tpu_custom_call.1} parent=1 // loop_header_branch
      %21 = sbr.rel (%p19) target = $region8
    $region5: #{tpu_custom_call.1} parent=1 // loop_body
      %s23 = ssub.s32 %s18, 1
      %s24 = ssub.s32 %s18, 2
      %s31 = sadd.s32 1, %s26
      %p32 = scmp.ge.s32.totalorder %s31, 1
      %s33 = scalar_select %p32, 0, %s31
      %s34 = sadd.s32 1, %s25
      %s35 = scalar_select %p32, %s34, %s25
      %p36 = scmp.ge.s32.totalorder %s35, 2
      %s37 = scalar_select %p36, 0, %s35
      %s38 = ssub.s32 %s25, %s37
      %s39 = ssub.s32 %s26, %s33
      %s40 = sor.u32 %s38, %s39
      %p41 = scmp.eq.s32.totalorder %s40, 0
      %s43 = sadd.s32 %s42, 1
      %s44 = scalar_select %p41, %s42, %s43
      %p47 = pneg %p41
      %p48 = scmp.eq.s32.totalorder %s18, 1
      %p49 = por %p47, %p48
      %p50 = scmp.ne.s32.totalorder %s42, %s45
      %p51 = scmp.eq.s32.totalorder %s18, 0
      %p52 = por %p50, %p51
      %p53 = scmp.ne.s32.totalorder %s42, %s45
      %p54 = scmp.eq.s32.totalorder %s23, 1
      %p55 = por %p53, %p54
      %p56 = scmp.ne.s32.totalorder %s45, %s46
      %p57 = scmp.eq.s32.totalorder %s23, 0
      %p58 = por %p56, %p57
      %p59 = scmp.ne.s32.totalorder %s45, %s46
      %p60 = scmp.eq.s32.totalorder %s24, 1
      %p61 = por %p59, %p60
      %p63 = scmp.ne.s32.totalorder %s46, %s62
      %p64 = scmp.eq.s32.totalorder %s24, 0
      %p65 = por %p63, %p64
      %s67 = sadd.s32 %s66, 1
      %p70 = scmp.eq.s32.totalorder %s18, 1
      %p71 = scmp.ne.s32.totalorder %s66, %s68
      %p72 = scmp.eq.s32.totalorder %s18, 0
      %p73 = por %p71, %p72
      %p74 = scmp.ne.s32.totalorder %s66, %s68
      %p75 = scmp.eq.s32.totalorder %s23, 1
      %p76 = por %p74, %p75
      %p77 = scmp.ne.s32.totalorder %s68, %s69
      %p78 = scmp.eq.s32.totalorder %s23, 0
      %p79 = por %p77, %p78
      %p80 = scmp.ne.s32.totalorder %s68, %s69
      %p81 = scmp.eq.s32.totalorder %s24, 1
      %p82 = por %p80, %p81
      %p84 = scmp.ne.s32.totalorder %s69, %s83
      %p85 = scmp.eq.s32.totalorder %s24, 0
      %p86 = por %p84, %p85
      %s88 = sadd.s32 %s87, 1
      %p91 = scmp.eq.s32.totalorder %s18, 1
      %p92 = scmp.ne.s32.totalorder %s87, %s89
      %p93 = scmp.eq.s32.totalorder %s18, 0
      %p94 = por %p92, %p93
      %p95 = scmp.ne.s32.totalorder %s87, %s89
      %p96 = scmp.eq.s32.totalorder %s23, 1
      %p97 = por %p95, %p96
      %p98 = scmp.ne.s32.totalorder %s89, %s90
      %p99 = scmp.eq.s32.totalorder %s23, 0
      %p100 = por %p98, %p99
      %p101 = scmp.ne.s32.totalorder %s89, %s90
      %p102 = scmp.eq.s32.totalorder %s24, 1
      %p103 = por %p101, %p102
      %p105 = scmp.ne.s32.totalorder %s90, %s104
      %p106 = scmp.eq.s32.totalorder %s24, 0
      %p107 = por %p105, %p106
      %s109 = sadd.s32 %s108, 1
      %p112 = scmp.eq.s32.totalorder %s18, 1
      %p113 = scmp.ne.s32.totalorder %s108, %s110
      %p114 = scmp.eq.s32.totalorder %s18, 0
      %p115 = por %p113, %p114
      %p116 = scmp.ne.s32.totalorder %s108, %s110
      %p117 = scmp.eq.s32.totalorder %s23, 1
      %p118 = por %p116, %p117
      %p119 = scmp.ne.s32.totalorder %s110, %s111
      %p120 = scmp.eq.s32.totalorder %s23, 0
      %p121 = por %p119, %p120
      %p122 = scmp.ne.s32.totalorder %s110, %s111
      %p123 = scmp.eq.s32.totalorder %s24, 1
      %p124 = por %p122, %p123
      %p126 = scmp.ne.s32.totalorder %s111, %s125
      %p127 = scmp.eq.s32.totalorder %s24, 0
      %p128 = por %p126, %p127
      %s130 = sadd.s32 %s129, 1
      %p133 = scmp.eq.s32.totalorder %s18, 1
      %p134 = scmp.ne.s32.totalorder %s129, %s131
      %p135 = scmp.eq.s32.totalorder %s18, 0
      %p136 = por %p134, %p135
      %p137 = scmp.ne.s32.totalorder %s129, %s131
      %p138 = scmp.eq.s32.totalorder %s23, 1
      %p139 = por %p137, %p138
      %p140 = scmp.ne.s32.totalorder %s131, %s132
      %p141 = scmp.eq.s32.totalorder %s23, 0
      %p142 = por %p140, %p141
      %p143 = scmp.ne.s32.totalorder %s131, %s132
      %p144 = scmp.eq.s32.totalorder %s24, 1
      %p145 = por %p143, %p144
      %p147 = scmp.ne.s32.totalorder %s132, %s146
      %p148 = scmp.eq.s32.totalorder %s24, 0
      %p149 = por %p147, %p148
      %s150 = ssub.s32 %s25, %s37
      %s151 = ssub.s32 %s26, %s33
      %s152 = sor.u32 %s150, %s151
      %p153 = scmp.eq.s32.totalorder %s152, 0
      %s155 = sadd.s32 %s154, 1
      %s156 = scalar_select %p153, %s154, %s155
      %p159 = pneg %p153
      %p160 = scmp.eq.s32.totalorder %s18, 1
      %p161 = por %p159, %p160
      %p162 = scmp.ne.s32.totalorder %s154, %s157
      %p163 = scmp.eq.s32.totalorder %s18, 0
      %p164 = por %p162, %p163
      %p165 = scmp.ne.s32.totalorder %s154, %s157
      %p166 = scmp.eq.s32.totalorder %s23, 1
      %p167 = por %p165, %p166
      %p168 = scmp.ne.s32.totalorder %s157, %s158
      %p169 = scmp.eq.s32.totalorder %s23, 0
      %p170 = por %p168, %p169
      %p171 = scmp.ne.s32.totalorder %s157, %s158
      %p172 = scmp.eq.s32.totalorder %s24, 1
      %p173 = por %p171, %p172
      %p175 = scmp.ne.s32.totalorder %s158, %s174
      %p176 = scmp.eq.s32.totalorder %s24, 0
      %p177 = por %p175, %p176
      %p178 = scmp.le.s32.totalorder 1, %s18
      %p179 = scmp.lt.s32.totalorder %s18, 3
      %p180 = pnand %p178, %p179
      %p181 = pneg %p180
      // Predicated region
      $region9: #{tpu_custom_call.1} parent=5 // pred_check
        _
      $region10: #{tpu_custom_call.1} parent=5 // pred_check_branch
        %183 = sbr.rel (%p180) target = $region12
      $region11: #{tpu_custom_call.1} parent=5 // pred_region
        %s184 = ssub.s32 %s18, 1
        // Predicated region
        $region13: #{tpu_custom_call.1} parent=11 // pred_check
          %p185 = pneg %p79
        $region14: #{tpu_custom_call.1} parent=11 // pred_check_branch
          %187 = sbr.rel (%p185) target = $region16
        $region15: #{tpu_custom_call.1} parent=11 // pred_region
          _
        $region16: #{tpu_custom_call.1} parent=11 // pred_fallthru
          _
        // Predicated region
        $region17: #{tpu_custom_call.1} parent=11 // pred_check
          %p188 = pneg %p100
        $region18: #{tpu_custom_call.1} parent=11 // pred_check_branch
          %190 = sbr.rel (%p188) target = $region20
        $region19: #{tpu_custom_call.1} parent=11 // pred_region
          _
        $region20: #{tpu_custom_call.1} parent=11 // pred_fallthru
          _
        // Predicated region
        $region21: #{tpu_custom_call.1} parent=11 // pred_check
          %p191 = pneg %p121
        $region22: #{tpu_custom_call.1} parent=11 // pred_check_branch
          %193 = sbr.rel (%p191) target = $region24
        $region23: #{tpu_custom_call.1} parent=11 // pred_region
          %s195 = ssub.s32 256, 256
          %196 = vsyncadd [#allocation6], %s195
          %s197 = sshll.u32 [#allocation5], 4
          %s198 = int_to_ptr.vmem [resolvable:$true] %s197
          %203 = dma.hbm_to_vmem [thread:$0]  %s3, 256, %s198, [#allocation6], 64, 64, 4
        $region24: #{tpu_custom_call.1} parent=11 // pred_fallthru
          _
        // Predicated region
        $region25: #{tpu_custom_call.1} parent=11 // pred_check
          %p204 = pneg %p142
        $region26: #{tpu_custom_call.1} parent=11 // pred_check_branch
          %206 = sbr.rel (%p204) target = $region28
        $region27: #{tpu_custom_call.1} parent=11 // pred_region
          _
        $region28: #{tpu_custom_call.1} parent=11 // pred_fallthru
          _
      $region12: #{tpu_custom_call.1} parent=5 // pred_fallthru
        _
      %p207 = scmp.lt.s32.totalorder %s18, 2
      // Predicated region
      $region29: #{tpu_custom_call.1} parent=5 // pred_check
        %p208 = pneg %p207
      $region30: #{tpu_custom_call.1} parent=5 // pred_check_branch
        %210 = sbr.rel (%p208) target = $region32
      $region31: #{tpu_custom_call.1} parent=5 // pred_region
        // Predicated region
        $region33: #{tpu_custom_call.1} parent=31 // pred_check
          %p211 = pneg %p52
        $region34: #{tpu_custom_call.1} parent=31 // pred_check_branch
          %213 = sbr.rel (%p211) target = $region36
        $region35: #{tpu_custom_call.1} parent=31 // pred_region
          %s214 = sand.u32 %s42, 1
          %s215 = scalar_lea.sflag [#allocation3], %s214
          %s216 = sand.u32 %s42, 1
          %s217 = smul.addr %s216, 8
          %s218 = scalar_lea.vmem [#allocation2], %s217
          %s220 = ssub.s32 128, 128
          %221 = vsyncadd %s215, %s220
          %s222 = sadd.s32 %s26, %s25
          %s223 = smul.addr %s222, 128
          %s224 = scalar_lea.hbm %s0, %s223
          %s226 = sshll.u32 %s218, 4
          %s227 = int_to_ptr.vmem [resolvable:$true] %s226
          %229 = dma.hbm_to_vmem [thread:$0]  %s224, 128, %s227, %s215
        $region36: #{tpu_custom_call.1} parent=31 // pred_fallthru
          _
      $region32: #{tpu_custom_call.1} parent=5 // pred_fallthru
        _
      %p230 = scmp.le.s32.totalorder 1, %s18
      %p231 = scmp.lt.s32.totalorder %s18, 3
      %p232 = pnand %p230, %p231
      %p233 = pneg %p232
      // Predicated region
      $region37: #{tpu_custom_call.1} parent=5 // pred_check
        _
      $region38: #{tpu_custom_call.1} parent=5 // pred_check_branch
        %235 = sbr.rel (%p232) target = $region40
      $region39: #{tpu_custom_call.1} parent=5 // pred_region
        %s236 = ssub.s32 %s18, 1
        %s237 = sand.u32 %s45, 1
        %s238 = scalar_lea.sflag [#allocation3], %s237
        %s239 = sand.u32 %s45, 1
        %s240 = smul.addr %s239, 8
        %s241 = scalar_lea.vmem [#allocation2], %s240
        // Predicated region
        $region41: #{tpu_custom_call.1} parent=39 // pred_check
          %p242 = pneg %p58
        $region42: #{tpu_custom_call.1} parent=39 // pred_check_branch
          %244 = sbr.rel (%p242) target = $region44
        $region43: #{tpu_custom_call.1} parent=39 // pred_region
          %245 = dma.done %s238, 128
        $region44: #{tpu_custom_call.1} parent=39 // pred_fallthru
          _
        // Predicated region
        $region45: #{tpu_custom_call.1} parent=39 // pred_check
          %p246 = pneg %p121
        $region46: #{tpu_custom_call.1} parent=39 // pred_check_branch
          %248 = sbr.rel (%p246) target = $region48
        $region47: #{tpu_custom_call.1} parent=39 // pred_region
          %249 = dma.done [#allocation6], 256
        $region48: #{tpu_custom_call.1} parent=39 // pred_fallthru
          _
        %s250 = sand.u32 %s45, 1
        %s251 = scalar_lea.sflag [#allocation3], %s250
        %s252 = sand.u32 %s45, 1
        %s253 = smul.addr %s252, 8
        %s254 = scalar_lea.vmem [#allocation2], %s253
        %p255 = pneg %p58
        %p256 = pneg %p55
        %p257 = pneg %p79
        %p258 = pneg %p76
        %p259 = pneg %p100
        %p260 = pneg %p97
        %p261 = pneg %p121
        %p262 = pneg %p118
        %p263 = pneg %p142
        %p264 = pneg %p139
        %p265 = pneg %p170
        %p266 = pneg %p167
        %s267 = sand.u32 %s157, 1
        %s268 = scalar_lea.sflag [#allocation4], %s267
        %s269 = sand.u32 %s157, 1
        %s270 = smul.addr %s269, 4
        %s271 = scalar_lea.vmem [#allocation7], %s270
        %v273 = vld [vmem:[%s241] sm:$0xff]
        %vm274 = vcmask 261120
        %v275 = vsel %vm274, %v273, 0.0
        %276 = vadd.xlane.f32.xlu0 %v275
        %v277 = vpop.xlane.xlu0 %276
        %v278 = vrcp.pop 32.0
        %v279 = vmul.f32 %v277, %v278
        %v280 = vsub.f32 %v273, %v279
        %v281 = vmul.f32 %v280, %v280
        %v282 = vsel %vm274, %v281, 0.0
        %283 = vadd.xlane.f32.xlu0 %v282
        %v284 = vpop.xlane.xlu0 %283
        %v285 = vmul.f32 %v284, %v278
        %v286 = vadd.f32 %v285, 1e-05
        %v287 = vrsqrt.pop %v286
        %v288 = vmul.f32 %v280, %v287
        %v289 = vld [vmem:[%s1] sm:$0x1]
        %v291 = vlaneseq
        %v292 = vshrl.u32 %v291, 7
        %v293 = vsub.s32 0, %v292
        %v294 = vrot.slane %v289, %v293
        %v296 = vmul.f32 %v288, %v294
        %v297 = vld [vmem:[%s2] sm:$0x1]
        %v299 = vlaneseq
        %v300 = vshrl.u32 %v299, 7
        %v301 = vsub.s32 0, %v300
        %v302 = vrot.slane %v297, %v301
        %v304 = vadd.f32 %v296, %v302
        %v305 = vpack.c.bf16 %v304, %v304
        %v306 = vld [vmem:[#allocation5] sm:$0xf]
        %v307 = vld [vmem:[#allocation5 + $0x4] sm:$0xf]
        %v308 = vld [vmem:[#allocation5 + $0x8] sm:$0xf]
        %v309 = vld [vmem:[#allocation5 + $0xc] sm:$0xf]
        %v310 = vld [vmem:[%s4] sm:$0x1]
        %v312 = vlaneseq
        %v313 = vshrl.u32 %v312, 7
        %v314 = vsub.s32 0, %v313
        %v315 = vrot.slane %v310, %v314
        %v321 = vunpack.c.l.b16 %v306
        %v322 = vunpack.c.l.b16 %v307
        %v323 = vunpack.c.l.b16 %v308
        %v324 = vunpack.c.l.b16 %v309
        %v325 = vpack.c.b16 %v322, %v321
        %v326 = vpack.c.b16 %v324, %v323
        %v330 = vsel %vm274, %v305, 0
        %332 = vmatprep.subr.bf16.mxu0 0
        %333 = vmatpush1.bf16.msra.mxu0 %v325
        %334 = vmatprep.subr.bf16.mxu0 0
        %335 = vmatpush1.bf16.msra.mxu0 %v326
        %336 = vmatprep.subr.bf16.mxu0 0
        %337 = vmatpush1.bf16.msra.mxu0 0
        %338 = vmatprep.subr.bf16.mxu0 0
        %339 = vmatpush1.bf16.msra.mxu0 0
        %340 = vmatprep.subr.bf16.mxu0 0
        %341 = vmatpush1.bf16.msra.mxu0 0
        %342 = vmatprep.subr.bf16.mxu0 0
        %343 = vmatpush1.bf16.msra.mxu0 0
        %344 = vmatprep.subr.bf16.mxu0 0
        %345 = vmatpush1.bf16.msra.mxu0 0
        %346 = vmatprep.subr.bf16.mxu0 0
        %347 = vmatpush1.bf16.msra.mxu0 0
        %348 = vmatprep.subr.bf16.mxu0 0
        %349 = vmatpush1.bf16.msra.mxu0 0
        %350 = vmatprep.subr.bf16.mxu0 0
        %351 = vmatpush1.bf16.msra.mxu0 0
        %352 = vmatprep.subr.bf16.mxu0 0
        %353 = vmatpush1.bf16.msra.mxu0 0
        %354 = vmatprep.subr.bf16.mxu0 0
        %355 = vmatpush1.bf16.msra.mxu0 0
        %356 = vmatprep.subr.bf16.mxu0 0
        %357 = vmatpush1.bf16.msra.mxu0 0
        %358 = vmatprep.subr.bf16.mxu0 0
        %359 = vmatpush1.bf16.msra.mxu0 0
        %360 = vmatprep.subr.bf16.mxu0 0
        %361 = vmatpush1.bf16.msra.mxu0 0
        %362 = vmatprep.subr.bf16.mxu0 0
        %363 = vmatpush1.bf16.msra.mxu0 0
        %364 = vmatprep.mubr.bf16.mxu0 0
        %365 = vmatmul.mubr.bf16.gmra.mrb[0].mxu0 %v330
        %v366 = vpop.f32.mrb[0].mxu0
        %v367 = vadd.f32 %v315, %v366
        %v368 = vpop.f32.mrb[0].mxu0
        %v369 = vpop.f32.mrb[0].mxu0
        %v370 = vpop.f32.mrb[0].mxu0
        %371 = vdwg.mxu0
        %v372 = vpack.c.bf16 %v367, %v367
        %vm373 = vcmask 781312
        %374 = vst.msk [vmem:[%s271] sm:$0xf] %vm373, %v372
        %s375 = sand.u32 %s157, 1
        %s376 = scalar_lea.sflag [#allocation4], %s375
        %s377 = sand.u32 %s157, 1
        %s378 = smul.addr %s377, 4
        %s379 = scalar_lea.vmem [#allocation7], %s378
        // Predicated region
        $region49: #{tpu_custom_call.1} parent=39 // pred_check
          %p380 = pneg %p167
        $region50: #{tpu_custom_call.1} parent=39 // pred_check_branch
          %382 = sbr.rel (%p380) target = $region52
        $region51: #{tpu_custom_call.1} parent=39 // pred_region
          %s384 = ssub.s32 64, 64
          %385 = vsyncadd %s376, %s384
          %s386 = sadd.s32 %s28, %s27
          %s387 = smul.addr %s386, 64
          %s388 = scalar_lea.hbm %s5, %s387
          %s390 = sshll.u32 %s379, 4
          %s391 = int_to_ptr.vmem [resolvable:$true] %s390
          %393 = dma.vmem_to_hbm [thread:$0]  %s391, 64, %s388, %s376
        $region52: #{tpu_custom_call.1} parent=39 // pred_fallthru
          _
      $region40: #{tpu_custom_call.1} parent=5 // pred_fallthru
        _
      %p394 = scmp.le.s32.totalorder 2, %s18
      // Predicated region
      $region53: #{tpu_custom_call.1} parent=5 // pred_check
        %p395 = pneg %p394
      $region54: #{tpu_custom_call.1} parent=5 // pred_check_branch
        %397 = sbr.rel (%p395) target = $region56
      $region55: #{tpu_custom_call.1} parent=5 // pred_region
        %s398 = ssub.s32 %s18, 2
        // Predicated region
        $region57: #{tpu_custom_call.1} parent=55 // pred_check
          %p399 = pneg %p173
        $region58: #{tpu_custom_call.1} parent=55 // pred_check_branch
          %401 = sbr.rel (%p399) target = $region60
        $region59: #{tpu_custom_call.1} parent=55 // pred_region
          %s402 = sand.u32 %s158, 1
          %s403 = scalar_lea.sflag [#allocation4], %s402
          %s404 = sand.u32 %s158, 1
          %s405 = smul.addr %s404, 4
          %s406 = scalar_lea.vmem [#allocation7], %s405
          %407 = dma.done %s403, 64
        $region60: #{tpu_custom_call.1} parent=55 // pred_fallthru
          _
      $region56: #{tpu_custom_call.1} parent=5 // pred_fallthru
        _
    $region6: #{tpu_custom_call.1} parent=1 // loop_footer
      %s22 = sadd.s32 1, %s18
    $region7: #{tpu_custom_call.1} parent=1 // loop_footer_branch
      %17 = sbr.rel target = $region3
    $region8: #{tpu_custom_call.1} parent=1 // loop_exit
      _
    %408 = vsyncpa [#allocation3], 1
    %s409 = scalar_lea.sflag [#allocation3], 1
    %410 = vsyncpa %s409, 1
    %411 = vsyncpa [#allocation6], 1
    %412 = vsyncpa [#allocation4], 1
    %s413 = scalar_lea.sflag [#allocation4], 1
    %414 = vsyncpa %s413, 1

</llo_original>
